<compile_context>
chip_gen: v6e
topology: v6e:2x2x1
jax: 0.10.0
libtpu: 0.0.40
codegen_flags: <defaults>
</compile_context>

<pallas_src>
import jax
import jax.numpy as jnp
from jax import lax
from jax.experimental import pallas as pl
from jax.experimental.pallas import tpu as pltpu


def _round_up(n, m):
    return ((n + m - 1) // m) * m


def mlp_kernel(x_ref, w1_ref, b1_ref, w2_ref, b2_ref, w3_ref, b3_ref, o_ref):
    # Layer 1: (bb, 32) @ (32, 64) -> f32, bias + ReLU in f32.
    h1 = jnp.dot(x_ref[...], w1_ref[...], preferred_element_type=jnp.float32)
    h1 = jnp.maximum(h1 + b1_ref[...], 0.0)

    # Layer 2: (bb, 64) @ (64, 32) -> f32, bias + ReLU in f32.
    h2 = jnp.dot(h1.astype(w2_ref.dtype), w2_ref[...],
                 preferred_element_type=jnp.float32)
    h2 = jnp.maximum(h2 + b2_ref[...], 0.0)

    # Layer 3, lane-dense: out_T = (w3^T @ h2^T) with shape (2, bb).
    # Contract w3 dim 0 (K=32) with h2 dim 1 (K=32).
    out_t = lax.dot_general(
        w3_ref[...], h2.astype(w3_ref.dtype),
        dimension_numbers=(((0,), (1,)), ((), ())),
        preferred_element_type=jnp.float32,
    )
    o_ref[...] = (out_t + b3_ref[...]).astype(o_ref.dtype)  # b3 is (2, 1)


def stock_prediction_forward(x, params, *, block_b=1024,
                             compute_dtype=jnp.bfloat16):
    """x: (B, 25) float32. params: dict of w1,b1,w2,b2,w3,b3 (as in init_params).

    Returns (B, 2) float32 logits, matching the PyTorch module's forward.
    """
    B, F = x.shape
    assert F == 25
    F_PAD = 32  # pad features to a lane/sublane-friendly width

    # Effective row tile and padded batch (rows padded with zeros, sliced off later).
    if B <= block_b:
        bb = _round_up(max(B, 8), 8)
        B_pad = bb
    else:
        bb = _round_up(block_b, 8)
        B_pad = _round_up(B, bb)
    grid = (B_pad // bb,)

    # One-time pads / casts in HBM.
    x_p = jnp.pad(x, ((0, B_pad - B), (0, F_PAD - F))).astype(compute_dtype)
    w1 = jnp.pad(params["w1"], ((0, F_PAD - F), (0, 0))).astype(compute_dtype)
    w2 = params["w2"].astype(compute_dtype)
    w3 = params["w3"].astype(compute_dtype)
    b1 = params["b1"].astype(jnp.float32)                  # (1, 64)
    b2 = params["b2"].astype(jnp.float32)                  # (1, 32)
    b3 = params["b3"].reshape(2, 1).astype(jnp.float32)    # (2, 1) for (2, bb) out

    def full2d(arr):
        return pl.BlockSpec(arr.shape, lambda i: (0, 0))

    out_t = pl.pallas_call(
        mlp_kernel,
        out_shape=jax.ShapeDtypeStruct((2, B_pad), jnp.float32),
        grid_spec=pl.GridSpec(
            grid=grid,
            in_specs=[
                pl.BlockSpec((bb, F_PAD), lambda i: (i, 0)),  # x row tile
                full2d(w1), full2d(b1),
                full2d(w2), full2d(b2),
                full2d(w3), full2d(b3),
            ],
            out_specs=pl.BlockSpec((2, bb), lambda i: (0, i)),  # lane-dense output
        ),
        compiler_params=pltpu.CompilerParams(
            dimension_semantics=("parallel",),
        ),
    )(x_p, w1, b1, w2, b2, w3, b3)

    # Back to the PyTorch layout: (B, 2).
    return out_t[:, :B].T


def init_params(key):
    """Deterministic init mimicking nn.Linear default (uniform +/- 1/sqrt(fan_in)).

    Weights stored as (in_features, out_features) so y = x @ W + b.
    """
    def linear(key, fan_in, fan_out):
        kw, kb = jax.random.split(key)
        bound = 1.0 / jnp.sqrt(jnp.float32(fan_in))
        w = jax.random.uniform(kw, (fan_in, fan_out), jnp.float32, -bound, bound)
        b = jax.random.uniform(kb, (1, fan_out), jnp.float32, -bound, bound)
        return w, b

    k1, k2, k3 = jax.random.split(key, 3)
    w1, b1 = linear(k1, 25, 64)
    w2, b2 = linear(k2, 64, 32)
    w3, b3 = linear(k3, 32, 2)
    return {"w1": w1, "b1": b1, "w2": w2, "b2": b2, "w3": w3, "b3": b3}


def reference_forward(x, p):
    h1 = jnp.maximum(x @ p["w1"] + p["b1"], 0.0)
    h2 = jnp.maximum(h1 @ p["w2"] + p["b2"], 0.0)
    return h2 @ p["w3"] + p["b3"]


if __name__ == "__main__":
    key = jax.random.PRNGKey(0)
    kx, kp = jax.random.split(key)

    B = 8  # small batch for the check (wrapper also handles large B / partial tiles)
    x = jax.random.normal(kx, (B, 25), dtype=jnp.float32)
    params = init_params(kp)

    ref = reference_forward(x, params)

    # f32 compute path: should match the reference tightly.
    out_f32 = jax.block_until_ready(
        stock_prediction_forward(x, params, compute_dtype=jnp.float32))
    assert out_f32.shape == (B, 2)
    assert jnp.allclose(out_f32, ref, atol=1e-4, rtol=1e-4), "f32 mismatch vs reference"

    # bf16 compute path (default, HBM-traffic optimized): looser tolerance.
    out_bf16 = jax.block_until_ready(stock_prediction_forward(x, params))
    assert out_bf16.shape == (B, 2)
    assert jnp.allclose(out_bf16, ref, atol=5e-2, rtol=5e-2), "bf16 mismatch vs reference"

    print("KERNEL_OK")
</pallas_src>

<mosaic_0001>
module attributes {stable_mosaic.version = 11 : i64} {
  func.func @mlp_kernel(%arg0: i32, %arg1: memref<8x32xf32, #tpu.memory_space<vmem>>, %arg2: memref<32x64xf32, #tpu.memory_space<vmem>>, %arg3: memref<1x64xf32, #tpu.memory_space<vmem>>, %arg4: memref<64x32xf32, #tpu.memory_space<vmem>>, %arg5: memref<1x32xf32, #tpu.memory_space<vmem>>, %arg6: memref<32x2xf32, #tpu.memory_space<vmem>>, %arg7: memref<2x1xf32, #tpu.memory_space<vmem>>, %arg8: memref<2x8xf32, #tpu.memory_space<vmem>>) attributes {dimension_semantics = [#tpu.dimension_semantics<parallel>], iteration_bounds = array<i64: 1>, scalar_prefetch = 0 : i64, scratch_operands = 0 : i64, tpu.core_type = #tpu.core_type<tc>, window_params = [{transform_indices = @transform_0, window_bounds = array<i64: 8, 32>}, {pipeline_mode = #tpu.pipeline_mode<synchronous>, transform_indices = @transform_1, window_bounds = array<i64: 32, 64>}, {pipeline_mode = #tpu.pipeline_mode<synchronous>, transform_indices = @transform_2, window_bounds = array<i64: 1, 64>}, {pipeline_mode = #tpu.pipeline_mode<synchronous>, transform_indices = @transform_3, window_bounds = array<i64: 64, 32>}, {pipeline_mode = #tpu.pipeline_mode<synchronous>, transform_indices = @transform_4, window_bounds = array<i64: 1, 32>}, {pipeline_mode = #tpu.pipeline_mode<synchronous>, transform_indices = @transform_5, window_bounds = array<i64: 32, 2>}, {pipeline_mode = #tpu.pipeline_mode<synchronous>, transform_indices = @transform_6, window_bounds = array<i64: 2, 1>}, {transform_indices = @transform_7, window_bounds = array<i64: 2, 8>}]} {
    %c0 = arith.constant 0 : index
    %c0_0 = arith.constant 0 : index
    %0 = vector.load %arg1[%c0, %c0_0] : memref<8x32xf32, #tpu.memory_space<vmem>>, vector<8x32xf32>
    %c0_1 = arith.constant 0 : index
    %c0_2 = arith.constant 0 : index
    %1 = vector.load %arg2[%c0_1, %c0_2] : memref<32x64xf32, #tpu.memory_space<vmem>>, vector<32x64xf32>
    %cst = arith.constant dense<0.000000e+00> : vector<8x64xf32>
    %2 = tpu.matmul %0, %1, %cst {dimension_numbers = #tpu.dot_dimension_numbers<[1], [0], [0], [1], [0, 0, 1, 1], [], []>} : vector<8x32xf32>, vector<32x64xf32>, vector<8x64xf32> -> vector<8x64xf32>
    %c0_3 = arith.constant 0 : index
    %c0_4 = arith.constant 0 : index
    %3 = vector.load %arg3[%c0_3, %c0_4] : memref<1x64xf32, #tpu.memory_space<vmem>>, vector<1x64xf32>
    %4 = vector.broadcast %3 : vector<1x64xf32> to vector<8x64xf32>
    %5 = arith.addf %2, %4 : vector<8x64xf32>
    %cst_5 = arith.constant 0.000000e+00 : f32
    %6 = vector.broadcast %cst_5 : f32 to vector<8x64xf32>
    %7 = arith.maximumf %5, %6 : vector<8x64xf32>
    %c0_6 = arith.constant 0 : index
    %c0_7 = arith.constant 0 : index
    %8 = vector.load %arg4[%c0_6, %c0_7] : memref<64x32xf32, #tpu.memory_space<vmem>>, vector<64x32xf32>
    %cst_8 = arith.constant dense<0.000000e+00> : vector<8x32xf32>
    %9 = tpu.matmul %7, %8, %cst_8 {dimension_numbers = #tpu.dot_dimension_numbers<[1], [0], [0], [1], [0, 0, 1, 1], [], []>} : vector<8x64xf32>, vector<64x32xf32>, vector<8x32xf32> -> vector<8x32xf32>
    %c0_9 = arith.constant 0 : index
    %c0_10 = arith.constant 0 : index
    %10 = vector.load %arg5[%c0_9, %c0_10] : memref<1x32xf32, #tpu.memory_space<vmem>>, vector<1x32xf32>
    %11 = vector.broadcast %10 : vector<1x32xf32> to vector<8x32xf32>
    %12 = arith.addf %9, %11 : vector<8x32xf32>
    %cst_11 = arith.constant 0.000000e+00 : f32
    %13 = vector.broadcast %cst_11 : f32 to vector<8x32xf32>
    %14 = arith.maximumf %12, %13 : vector<8x32xf32>
    %c0_12 = arith.constant 0 : index
    %c0_13 = arith.constant 0 : index
    %15 = vector.load %arg6[%c0_12, %c0_13] : memref<32x2xf32, #tpu.memory_space<vmem>>, vector<32x2xf32>
    %cst_14 = arith.constant dense<0.000000e+00> : vector<2x8xf32>
    %16 = tpu.matmul %15, %14, %cst_14 {dimension_numbers = #tpu.dot_dimension_numbers<[0], [1], [1], [0], [0, 1, 1, 0], [], []>} : vector<32x2xf32>, vector<8x32xf32>, vector<2x8xf32> -> vector<2x8xf32>
    %c0_15 = arith.constant 0 : index
    %c0_16 = arith.constant 0 : index
    %17 = vector.load %arg7[%c0_15, %c0_16] : memref<2x1xf32, #tpu.memory_space<vmem>>, vector<2x1xf32>
    %18 = vector.broadcast %17 : vector<2x1xf32> to vector<2x8xf32>
    %19 = arith.addf %16, %18 : vector<2x8xf32>
    %c0_17 = arith.constant 0 : index
    %c0_18 = arith.constant 0 : index
    %20 = vector.load %arg8[%c0_17, %c0_18] : memref<2x8xf32, #tpu.memory_space<vmem>>, vector<2x8xf32>
    tpu.vector_store %arg8[%c0_17, %c0_18], %19 {strides = array<i32>} : memref<2x8xf32, #tpu.memory_space<vmem>>, vector<2x8xf32>,
    return
  }
  func.func @transform_0(%arg0: i32) -> (i32, i32) {
    %c0_i32 = arith.constant 0 : i32
    %c0_i32_0 = arith.constant 0 : i32
    return %arg0, %c0_i32 : i32, i32
  }
  func.func @transform_1(%arg0: i32) -> (i32, i32) {
    %c0_i32 = arith.constant 0 : i32
    %c0_i32_0 = arith.constant 0 : i32
    %c0_i32_1 = arith.constant 0 : i32
    return %c0_i32, %c0_i32_0 : i32, i32
  }
  func.func @transform_2(%arg0: i32) -> (i32, i32) {
    %c0_i32 = arith.constant 0 : i32
    %c0_i32_0 = arith.constant 0 : i32
    %c0_i32_1 = arith.constant 0 : i32
    return %c0_i32, %c0_i32_0 : i32, i32
  }
  func.func @transform_3(%arg0: i32) -> (i32, i32) {
    %c0_i32 = arith.constant 0 : i32
    %c0_i32_0 = arith.constant 0 : i32
    %c0_i32_1 = arith.constant 0 : i32
    return %c0_i32, %c0_i32_0 : i32, i32
  }
  func.func @transform_4(%arg0: i32) -> (i32, i32) {
    %c0_i32 = arith.constant 0 : i32
    %c0_i32_0 = arith.constant 0 : i32
    %c0_i32_1 = arith.constant 0 : i32
    return %c0_i32, %c0_i32_0 : i32, i32
  }
  func.func @transform_5(%arg0: i32) -> (i32, i32) {
    %c0_i32 = arith.constant 0 : i32
    %c0_i32_0 = arith.constant 0 : i32
    %c0_i32_1 = arith.constant 0 : i32
    return %c0_i32, %c0_i32_0 : i32, i32
  }
  func.func @transform_6(%arg0: i32) -> (i32, i32) {
    %c0_i32 = arith.constant 0 : i32
    %c0_i32_0 = arith.constant 0 : i32
    %c0_i32_1 = arith.constant 0 : i32
    return %c0_i32, %c0_i32_0 : i32, i32
  }
  func.func @transform_7(%arg0: i32) -> (i32, i32) {
    %c0_i32 = arith.constant 0 : i32
    %c0_i32_0 = arith.constant 0 : i32
    return %c0_i32, %arg0 : i32, i32
  }
}

</mosaic_0001>

<llo_original>
// kernel: tpu_custom_call.1
$region0: #{tpu_custom_call.1}
  #allocation0 [shape = 'u32[]', space=smem, size = 0x4, offset = 0x4, fixed_abs, tag = 'smem constant byte address 0x4 - core index']
  #allocation1 [shape = 'u32[144,128]{1,0:T(1,128)}', space=vmem, size = 0x12000, scoped, tag = 'internal scratch']
  %s0 = inlined_call_operand.vmem [shape: f32[8,32], index: 0, kind: input, shape index: {}]
  %s1 = inlined_call_operand.vmem [shape: f32[32,64], index: 1, kind: input, shape index: {}]
  %s2 = inlined_call_operand.vmem [shape: f32[1,64], index: 2, kind: input, shape index: {}]
  %s3 = inlined_call_operand.vmem [shape: f32[64,32], index: 3, kind: input, shape index: {}]
  %s4 = inlined_call_operand.vmem [shape: f32[1,32], index: 4, kind: input, shape index: {}]
  %s5 = inlined_call_operand.vmem [shape: f32[32,2], index: 5, kind: input, shape index: {}]
  %s6 = inlined_call_operand.vmem [shape: f32[2,1], index: 6, kind: input, shape index: {}]
  %s7 = inlined_call_operand.hbm [shape: f32[2,8], index: 7, kind: output, shape index: {}]
  %s8 = sld [smem:[#allocation0]]
  $region38: #{tpu_custom_call.1} parent=0
    _
  %s10 = ssub.s32 1, %s8
  %s11 = scalar_select 0, %s10, %s8
  $region1: #{tpu_custom_call.1} parent=0
    #allocation2 [shape = 'u8[1024]{0}', space=vmem, size = 0x400, scoped, tag = 'output window, operand 0, single buffered']
    #allocation3 [shape = 's32[1]{0}', space=sflag, size = 0x4, scoped, tag = 'scoped memory for tpu_custom_call.1']
    %12 = vsyncpa [#allocation3], 0
    // Predicated region
    $region2: #{tpu_custom_call.1} parent=1 // pred_check
      _
    $region3: #{tpu_custom_call.1} parent=1 // pred_check_branch
      %14 = sbr.rel (0) target = $region5
    $region4: #{tpu_custom_call.1} parent=1 // pred_region
      _
    $region5: #{tpu_custom_call.1} parent=1 // pred_fallthru
      _
    // Predicated region
    $region6: #{tpu_custom_call.1} parent=1 // pred_check
      _
    $region7: #{tpu_custom_call.1} parent=1 // pred_check_branch
      %16 = sbr.rel (0) target = $region9
    $region8: #{tpu_custom_call.1} parent=1 // pred_region
      _
    $region9: #{tpu_custom_call.1} parent=1 // pred_fallthru
      _
    // Predicated region
    $region10: #{tpu_custom_call.1} parent=1 // pred_check
      _
    $region11: #{tpu_custom_call.1} parent=1 // pred_check_branch
      %18 = sbr.rel (0) target = $region13
    $region12: #{tpu_custom_call.1} parent=1 // pred_region
      _
    $region13: #{tpu_custom_call.1} parent=1 // pred_fallthru
      _
    // Predicated region
    $region14: #{tpu_custom_call.1} parent=1 // pred_check
      _
    $region15: #{tpu_custom_call.1} parent=1 // pred_check_branch
      %20 = sbr.rel (0) target = $region17
    $region16: #{tpu_custom_call.1} parent=1 // pred_region
      _
    $region17: #{tpu_custom_call.1} parent=1 // pred_fallthru
      _
    // Predicated region
    $region18: #{tpu_custom_call.1} parent=1 // pred_check
      _
    $region19: #{tpu_custom_call.1} parent=1 // pred_check_branch
      %22 = sbr.rel (0) target = $region21
    $region20: #{tpu_custom_call.1} parent=1 // pred_region
      _
    $region21: #{tpu_custom_call.1} parent=1 // pred_fallthru
      _
    // Predicated region
    $region22: #{tpu_custom_call.1} parent=1 // pred_check
      _
    $region23: #{tpu_custom_call.1} parent=1 // pred_check_branch
      %24 = sbr.rel (0) target = $region25
    $region24: #{tpu_custom_call.1} parent=1 // pred_region
      _
    $region25: #{tpu_custom_call.1} parent=1 // pred_fallthru
      _
    // Predicated region
    $region26: #{tpu_custom_call.1} parent=1 // pred_check
      _
    $region27: #{tpu_custom_call.1} parent=1 // pred_check_branch
      %26 = sbr.rel (0) target = $region29
    $region28: #{tpu_custom_call.1} parent=1 // pred_region
      _
    $region29: #{tpu_custom_call.1} parent=1 // pred_fallthru
      _
    %v27 = vld [vmem:[%s0] sm:$0xff]
    %v28 = vld [vmem:[%s1] sm:$0xff]
    %v29 = vld [vmem:[%s1 + $0x8] sm:$0xff]
    %v30 = vld [vmem:[%s1 + $0x10] sm:$0xff]
    %v31 = vld [vmem:[%s1 + $0x18] sm:$0xff]
    %v32 = vld [vmem:[%s2] sm:$0x1]
    %v34 = vlaneseq
    %v35 = vshrl.u32 %v34, 7
    %v36 = vsub.s32 0, %v35
    %v37 = vrot.slane %v32, %v36
    %vm39 = vcmask 261120
    %v41 = vsel %vm39, %v27, 0
    %43 = vmatprep.subr.mxu0 0.0
    %44 = vmatpush1.msra.mxu0 0.0
    %45 = vmatprep.subr.mxu0 0.0
    %46 = vmatpush1.msra.mxu0 0.0
    %47 = vmatprep.subr.mxu0 0.0
    %48 = vmatpush1.msra.mxu0 0.0
    %49 = vmatprep.subr.mxu0 0.0
    %50 = vmatpush1.msra.mxu0 0.0
    %51 = vmatprep.subr.mxu0 0.0
    %52 = vmatpush1.msra.mxu0 0.0
    %53 = vmatprep.subr.mxu0 0.0
    %54 = vmatpush1.msra.mxu0 0.0
    %55 = vmatprep.subr.mxu0 0.0
    %56 = vmatpush1.msra.mxu0 0.0
    %57 = vmatprep.subr.mxu0 0.0
    %58 = vmatpush1.msra.mxu0 0.0
    %59 = vmatprep.subr.mxu0 0.0
    %60 = vmatpush1.msra.mxu0 0.0
    %61 = vmatprep.subr.mxu0 0.0
    %62 = vmatpush1.msra.mxu0 0.0
    %63 = vmatprep.subr.mxu0 0.0
    %64 = vmatpush1.msra.mxu0 0.0
    %65 = vmatprep.subr.mxu0 0.0
    %66 = vmatpush1.msra.mxu0 0.0
    %67 = vmatprep.subr.mxu0 0.0
    %68 = vmatpush1.msra.mxu0 %v31
    %69 = vmatprep.subr.mxu0 0.0
    %70 = vmatpush1.msra.mxu0 %v30
    %71 = vmatprep.subr.mxu0 0.0
    %72 = vmatpush1.msra.mxu0 %v29
    %73 = vmatprep.subr.mxu0 0.0
    %74 = vmatpush1.msra.mxu0 %v28
    %75 = vmatprep.subr.mxu0 0.0
    %76 = vmatpush2.msra.mxu0 0.0
    %77 = vmatprep.subr.mxu0 0.0
    %78 = vmatpush2.msra.mxu0 0.0
    %79 = vmatprep.subr.mxu0 0.0
    %80 = vmatpush2.msra.mxu0 0.0
    %81 = vmatprep.subr.mxu0 0.0
    %82 = vmatpush2.msra.mxu0 0.0
    %83 = vmatprep.subr.mxu0 0.0
    %84 = vmatpush2.msra.mxu0 0.0
    %85 = vmatprep.subr.mxu0 0.0
    %86 = vmatpush2.msra.mxu0 0.0
    %87 = vmatprep.subr.mxu0 0.0
    %88 = vmatpush2.msra.mxu0 0.0
    %89 = vmatprep.subr.mxu0 0.0
    %90 = vmatpush2.msra.mxu0 0.0
    %91 = vmatprep.subr.mxu0 0.0
    %92 = vmatpush2.msra.mxu0 0.0
    %93 = vmatprep.subr.mxu0 0.0
    %94 = vmatpush2.msra.mxu0 0.0
    %95 = vmatprep.subr.mxu0 0.0
    %96 = vmatpush2.msra.mxu0 0.0
    %97 = vmatprep.subr.mxu0 0.0
    %98 = vmatpush2.msra.mxu0 0.0
    %99 = vmatprep.subr.mxu0 0.0
    %100 = vmatpush2.msra.mxu0 0.0
    %101 = vmatprep.subr.mxu0 0.0
    %102 = vmatpush2.msra.mxu0 0.0
    %103 = vmatprep.subr.mxu0 0.0
    %104 = vmatpush2.msra.mxu0 0.0
    %105 = vmatprep.subr.mxu0 0.0
    %106 = vmatpush2.msra.mxu0 0.0
    %107 = vmatprep.mubr.f32.mxu0 0.0
    %108 = vmatmul.mubr.f32.gmra.mxu0 %v41
    %v109 = vpop.f32.mrf.mxu0
    %v110 = vadd.f32 %v37, %v109
    %v111 = vpop.f32.mrf.mxu0
    %112 = vdwg.mxu0
    %v113 = vmax.f32 %v110, 0.0
    %v114 = vld [vmem:[%s3] sm:$0xff]
    %v115 = vld [vmem:[%s3 + $0x8] sm:$0xff]
    %v116 = vld [vmem:[%s3 + $0x10] sm:$0xff]
    %v117 = vld [vmem:[%s3 + $0x18] sm:$0xff]
    %v118 = vld [vmem:[%s3 + $0x20] sm:$0xff]
    %v119 = vld [vmem:[%s3 + $0x28] sm:$0xff]
    %v120 = vld [vmem:[%s3 + $0x30] sm:$0xff]
    %v121 = vld [vmem:[%s3 + $0x38] sm:$0xff]
    %v122 = vld [vmem:[%s4] sm:$0x1]
    %v124 = vlaneseq
    %v125 = vshrl.u32 %v124, 7
    %v126 = vsub.s32 0, %v125
    %v127 = vrot.slane %v122, %v126
    %vm129 = vcmask 523264
    %v131 = vsel %vm129, %v113, 0
    %133 = vmatprep.subr.mxu0 0.0
    %134 = vmatpush1.msra.mxu0 0.0
    %135 = vmatprep.subr.mxu0 0.0
    %136 = vmatpush1.msra.mxu0 0.0
    %137 = vmatprep.subr.mxu0 0.0
    %138 = vmatpush1.msra.mxu0 0.0
    %139 = vmatprep.subr.mxu0 0.0
    %140 = vmatpush1.msra.mxu0 0.0
    %141 = vmatprep.subr.mxu0 0.0
    %142 = vmatpush1.msra.mxu0 0.0
    %143 = vmatprep.subr.mxu0 0.0
    %144 = vmatpush1.msra.mxu0 0.0
    %145 = vmatprep.subr.mxu0 0.0
    %146 = vmatpush1.msra.mxu0 0.0
    %147 = vmatprep.subr.mxu0 0.0
    %148 = vmatpush1.msra.mxu0 0.0
    %149 = vmatprep.subr.mxu0 0.0
    %150 = vmatpush1.msra.mxu0 %v121
    %151 = vmatprep.subr.mxu0 0.0
    %152 = vmatpush1.msra.mxu0 %v120
    %153 = vmatprep.subr.mxu0 0.0
    %154 = vmatpush1.msra.mxu0 %v119
    %155 = vmatprep.subr.mxu0 0.0
    %156 = vmatpush1.msra.mxu0 %v118
    %157 = vmatprep.subr.mxu0 0.0
    %158 = vmatpush1.msra.mxu0 %v117
    %159 = vmatprep.subr.mxu0 0.0
    %160 = vmatpush1.msra.mxu0 %v116
    %161 = vmatprep.subr.mxu0 0.0
    %162 = vmatpush1.msra.mxu0 %v115
    %163 = vmatprep.subr.mxu0 0.0
    %164 = vmatpush1.msra.mxu0 %v114
    %165 = vmatprep.subr.mxu0 0.0
    %166 = vmatpush2.msra.mxu0 0.0
    %167 = vmatprep.subr.mxu0 0.0
    %168 = vmatpush2.msra.mxu0 0.0
    %169 = vmatprep.subr.mxu0 0.0
    %170 = vmatpush2.msra.mxu0 0.0
    %171 = vmatprep.subr.mxu0 0.0
    %172 = vmatpush2.msra.mxu0 0.0
    %173 = vmatprep.subr.mxu0 0.0
    %174 = vmatpush2.msra.mxu0 0.0
    %175 = vmatprep.subr.mxu0 0.0
    %176 = vmatpush2.msra.mxu0 0.0
    %177 = vmatprep.subr.mxu0 0.0
    %178 = vmatpush2.msra.mxu0 0.0
    %179 = vmatprep.subr.mxu0 0.0
    %180 = vmatpush2.msra.mxu0 0.0
    %181 = vmatprep.subr.mxu0 0.0
    %182 = vmatpush2.msra.mxu0 0.0
    %183 = vmatprep.subr.mxu0 0.0
    %184 = vmatpush2.msra.mxu0 0.0
    %185 = vmatprep.subr.mxu0 0.0
    %186 = vmatpush2.msra.mxu0 0.0
    %187 = vmatprep.subr.mxu0 0.0
    %188 = vmatpush2.msra.mxu0 0.0
    %189 = vmatprep.subr.mxu0 0.0
    %190 = vmatpush2.msra.mxu0 0.0
    %191 = vmatprep.subr.mxu0 0.0
    %192 = vmatpush2.msra.mxu0 0.0
    %193 = vmatprep.subr.mxu0 0.0
    %194 = vmatpush2.msra.mxu0 0.0
    %195 = vmatprep.subr.mxu0 0.0
    %196 = vmatpush2.msra.mxu0 0.0
    %197 = vmatprep.mubr.f32.mxu0 0.0
    %198 = vmatmul.mubr.f32.gmra.mxu0 %v131
    %v199 = vpop.f32.mrf.mxu0
    %v200 = vadd.f32 %v127, %v199
    %v201 = vpop.f32.mrf.mxu0
    %202 = vdwg.mxu0
    %v203 = vmax.f32 %v200, 0.0
    %v204 = vld [vmem:[%s5] sm:$0xff]
    %v205 = vld [vmem:[%s5 + $0x8] sm:$0xff]
    %v206 = vld [vmem:[%s5 + $0x10] sm:$0xff]
    %v207 = vld [vmem:[%s5 + $0x18] sm:$0xff]
    %v208 = vld [vmem:[%s6] sm:$0x3]
    %210 = vset.pattern.permute.xlu0 0
    %211 = vperm.xlu0 %210, %v208
    %v212 = vpop.permute.xlu0 %211
    %214 = vxpose.xlu0.b32.start [1/16] %v204, 128
    %215 = vxpose.xlu0.b32.cont [2/16] %v205, 128
    %216 = vxpose.xlu0.b32.cont [3/16] %v206, 128
    %217 = vxpose.xlu0.b32.cont [4/16] %v207, 128
    %218 = vxpose.xlu0.b32.cont [5/16] 0.0, 128
    %219 = vxpose.xlu0.b32.cont [6/16] 0.0, 128
    %220 = vxpose.xlu0.b32.cont [7/16] 0.0, 128
    %221 = vxpose.xlu0.b32.cont [8/16] 0.0, 128
    %222 = vxpose.xlu0.b32.cont [9/16] 0.0, 128
    %223 = vxpose.xlu0.b32.cont [10/16] 0.0, 128
    %224 = vxpose.xlu0.b32.cont [11/16] 0.0, 128
    %225 = vxpose.xlu0.b32.cont [12/16] 0.0, 128
    %226 = vxpose.xlu0.b32.cont [13/16] 0.0, 128
    %227 = vxpose.xlu0.b32.cont [14/16] 0.0, 128
    %228 = vxpose.xlu0.b32.cont [15/16] 0.0, 128
    %229 = vxpose.xlu0.b32.end [16/16] 0.0, 128
    %v230 = vpop.trf.xlu0
    %v231 = vpop.trf.xlu0
    %v232 = vpop.trf.xlu0
    %v233 = vpop.trf.xlu0
    %v234 = vpop.trf.xlu0
    %v235 = vpop.trf.xlu0
    %v236 = vpop.trf.xlu0
    %v237 = vpop.trf.xlu0
    %v238 = vpop.trf.xlu0
    %v239 = vpop.trf.xlu0
    %v240 = vpop.trf.xlu0
    %v241 = vpop.trf.xlu0
    %v242 = vpop.trf.xlu0
    %v243 = vpop.trf.xlu0
    %v244 = vpop.trf.xlu0
    %v245 = vpop.trf.xlu0
    %v247 = vsel %vm39, %v230, 0
    %v250 = vsel %vm39, %v203, 0
    %252 = vmatprep.subr.mxu0 0.0
    %253 = vmatpush1.xpose.msra.mxu0 0.0
    %254 = vmatprep.subr.mxu0 0.0
    %255 = vmatpush1.xpose.msra.mxu0 0.0
    %256 = vmatprep.subr.mxu0 0.0
    %257 = vmatpush1.xpose.msra.mxu0 0.0
    %258 = vmatprep.subr.mxu0 0.0
    %259 = vmatpush1.xpose.msra.mxu0 0.0
    %260 = vmatprep.subr.mxu0 0.0
    %261 = vmatpush1.xpose.msra.mxu0 0.0
    %262 = vmatprep.subr.mxu0 0.0
    %263 = vmatpush1.xpose.msra.mxu0 0.0
    %264 = vmatprep.subr.mxu0 0.0
    %265 = vmatpush1.xpose.msra.mxu0 0.0
    %266 = vmatprep.subr.mxu0 0.0
    %267 = vmatpush1.xpose.msra.mxu0 0.0
    %268 = vmatprep.subr.mxu0 0.0
    %269 = vmatpush1.xpose.msra.mxu0 0.0
    %270 = vmatprep.subr.mxu0 0.0
    %271 = vmatpush1.xpose.msra.mxu0 0.0
    %272 = vmatprep.subr.mxu0 0.0
    %273 = vmatpush1.xpose.msra.mxu0 0.0
    %274 = vmatprep.subr.mxu0 0.0
    %275 = vmatpush1.xpose.msra.mxu0 0.0
    %276 = vmatprep.subr.mxu0 0.0
    %277 = vmatpush1.xpose.msra.mxu0 0.0
    %278 = vmatprep.subr.mxu0 0.0
    %279 = vmatpush1.xpose.msra.mxu0 0.0
    %280 = vmatprep.subr.mxu0 0.0
    %281 = vmatpush1.xpose.msra.mxu0 0.0
    %282 = vmatprep.subr.mxu0 0.0
    %283 = vmatpush1.xpose.msra.mxu0 %v250
    %284 = vmatprep.subr.mxu0 0.0
    %285 = vmatpush2.xpose.msra.mxu0 0.0
    %286 = vmatprep.subr.mxu0 0.0
    %287 = vmatpush2.xpose.msra.mxu0 0.0
    %288 = vmatprep.subr.mxu0 0.0
    %289 = vmatpush2.xpose.msra.mxu0 0.0
    %290 = vmatprep.subr.mxu0 0.0
    %291 = vmatpush2.xpose.msra.mxu0 0.0
    %292 = vmatprep.subr.mxu0 0.0
    %293 = vmatpush2.xpose.msra.mxu0 0.0
    %294 = vmatprep.subr.mxu0 0.0
    %295 = vmatpush2.xpose.msra.mxu0 0.0
    %296 = vmatprep.subr.mxu0 0.0
    %297 = vmatpush2.xpose.msra.mxu0 0.0
    %298 = vmatprep.subr.mxu0 0.0
    %299 = vmatpush2.xpose.msra.mxu0 0.0
    %300 = vmatprep.subr.mxu0 0.0
    %301 = vmatpush2.xpose.msra.mxu0 0.0
    %302 = vmatprep.subr.mxu0 0.0
    %303 = vmatpush2.xpose.msra.mxu0 0.0
    %304 = vmatprep.subr.mxu0 0.0
    %305 = vmatpush2.xpose.msra.mxu0 0.0
    %306 = vmatprep.subr.mxu0 0.0
    %307 = vmatpush2.xpose.msra.mxu0 0.0
    %308 = vmatprep.subr.mxu0 0.0
    %309 = vmatpush2.xpose.msra.mxu0 0.0
    %310 = vmatprep.subr.mxu0 0.0
    %311 = vmatpush2.xpose.msra.mxu0 0.0
    %312 = vmatprep.subr.mxu0 0.0
    %313 = vmatpush2.xpose.msra.mxu0 0.0
    %314 = vmatprep.subr.mxu0 0.0
    %315 = vmatpush2.xpose.msra.mxu0 0.0
    %316 = vmatprep.mubr.f32.mxu0 0.0
    %317 = vmatmul.mubr.f32.gmra.mxu0 %v247
    %v318 = vpop.f32.mrf.mxu0
    %v319 = vadd.f32 %v212, %v318
    %v320 = vpop.f32.mrf.mxu0
    %321 = vdwg.mxu0
    %vm322 = vcmask 58368
    %323 = vst.msk [vmem:[#allocation2] sm:$0x3] %vm322, %v319
    // Predicated region
    $region30: #{tpu_custom_call.1} parent=1 // pred_check
      _
    $region31: #{tpu_custom_call.1} parent=1 // pred_check_branch
      %325 = sbr.rel (0) target = $region33
    $region32: #{tpu_custom_call.1} parent=1 // pred_region
      %s327 = ssub.s32 32, 32
      %328 = vsyncadd [#allocation3], %s327
      %s330 = sshll.u32 [#allocation2], 4
      %s331 = int_to_ptr.vmem [resolvable:$true] %s330
      %333 = dma.vmem_to_hbm [thread:$0]  %s331, 32, %s7, [#allocation3]
    $region33: #{tpu_custom_call.1} parent=1 // pred_fallthru
      _
    // Predicated region
    $region34: #{tpu_custom_call.1} parent=1 // pred_check
      _
    $region35: #{tpu_custom_call.1} parent=1 // pred_check_branch
      %335 = sbr.rel (0) target = $region37
    $region36: #{tpu_custom_call.1} parent=1 // pred_region
      %336 = dma.done [#allocation3], 32
    $region37: #{tpu_custom_call.1} parent=1 // pred_fallthru
      _
    %337 = vsyncpa [#allocation3], 1

</llo_original>
